<compile_context>
chip_gen: v6e
topology: v6e:2x2x1
jax: 0.10.0
libtpu: 0.0.40
codegen_flags: <defaults>
</compile_context>

<pallas_src>
import jax
import jax.numpy as jnp
from jax.experimental import pallas as pl
from jax.experimental.pallas import tpu as pltpu


def _ensemble_kernel(x_ref, w1_ref, b1_ref, w2_ref, b2_ref, o_ref):
    # Single invocation: refs are the full member-stacked arrays in VMEM.
    x = x_ref[...]      # (N, B,   IN)
    w1 = w1_ref[...]    # (N, H,   IN)
    b1 = b1_ref[...]    # (N, 1,   H)
    w2 = w2_ref[...]    # (N, OUT, H)
    b2 = b2_ref[...]    # (N, 1,   OUT)

    # Layer 1: batched x[n] @ w1[n].T as a contraction over the last dim of
    # both operands (no transposed RHS materialized, MXU-direct).
    h = jax.lax.dot_general(
        x, w1,
        dimension_numbers=(((2,), (2,)), ((0,), (0,))),
        preferred_element_type=jnp.float32,
    ) + b1                               # (N, B, H)
    h = jnp.maximum(h, 0.0)              # ReLU on the VPU

    # Layer 2: batched h[n] @ w2[n].T, same contraction trick.
    y = jax.lax.dot_general(
        h, w2,
        dimension_numbers=(((2,), (2,)), ((0,), (0,))),
        preferred_element_type=jnp.float32,
    ) + b2                               # (N, B, OUT)

    o_ref[...] = y.astype(o_ref.dtype)


@jax.jit
def ensemble_forward_stacked(x, w1, b1, w2, b2):
    """x: (N, B, IN); parameters stacked over members. Returns (N, B, OUT).

    Single-shot kernel (no grid): at these tiny shapes the problem is purely
    overhead-bound, so the goal is one invocation, zero grid steps, and
    whole-array VMEM residency.  If BATCH/HIDDEN grow to production sizes,
    reintroduce a batch-blocked grid so double-buffered tiles stay inside the
    scoped-VMEM budget (32 MiB default on v6e/v7x, 16 MiB on v5e).
    """
    n, batch, in_f = x.shape
    hidden = w1.shape[1]
    out_f = w2.shape[1]

    # Advisory cost for XLA's scheduler around the custom call.
    flops = 2 * n * batch * (in_f * hidden + hidden * out_f)
    itemsize = jnp.dtype(x.dtype).itemsize
    bytes_accessed = itemsize * (
        x.size + w1.size + b1.size + w2.size + b2.size + n * batch * out_f
    )

    vmem = pl.BlockSpec(memory_space=pltpu.MemorySpace.VMEM)
    return pl.pallas_call(
        _ensemble_kernel,
        out_shape=jax.ShapeDtypeStruct((n, batch, out_f), x.dtype),
        in_specs=[vmem, vmem, vmem, vmem, vmem],
        out_specs=vmem,
        cost_estimate=pl.CostEstimate(
            flops=flops, transcendentals=0, bytes_accessed=bytes_accessed),
    )(x, w1, b1, w2, b2)


def ensemble_forward(x, params):
    """Mirrors Ensemble.forward: returns a Python list, one output per member."""
    # TODO(synk): the PyTorch Ensemble wraps arbitrary sub-modules; here every
    # member is a 2-layer ReLU MLP (the common case), stacked for one kernel.
    w1, b1, w2, b2 = params
    stacked = ensemble_forward_stacked(x, w1, b1, w2, b2)
    return [stacked[i] for i in range(x.shape[0])]


def _reference_forward(x, params):
    w1, b1, w2, b2 = params
    outs = []
    for i in range(x.shape[0]):
        h = jnp.maximum(x[i] @ w1[i].T + b1[i], 0.0)
        outs.append(h @ w2[i].T + b2[i])
    return outs


if __name__ == "__main__":
    # Small, deterministic shapes consistent with the module.
    NUM_MODELS = 3
    BATCH = 8
    IN_F = 32
    HIDDEN = 64
    OUT_F = 16

    key = jax.random.PRNGKey(0)
    kx, kw1, kb1, kw2, kb2 = jax.random.split(key, 5)

    # x[i] is the input for ensemble member i.
    x = jax.random.normal(kx, (NUM_MODELS, BATCH, IN_F), dtype=jnp.float32)

    # Per-member parameters (nn.Linear-style shapes).
    w1 = jax.random.normal(kw1, (NUM_MODELS, HIDDEN, IN_F), dtype=jnp.float32) * 0.1
    b1 = jax.random.normal(kb1, (NUM_MODELS, 1, HIDDEN), dtype=jnp.float32) * 0.1
    w2 = jax.random.normal(kw2, (NUM_MODELS, OUT_F, HIDDEN), dtype=jnp.float32) * 0.1
    b2 = jax.random.normal(kb2, (NUM_MODELS, 1, OUT_F), dtype=jnp.float32) * 0.1
    params = (w1, b1, w2, b2)

    outs = ensemble_forward(x, params)
    outs = [jax.block_until_ready(o) for o in outs]

    refs = _reference_forward(x, params)
    for o, r in zip(outs, refs):
        assert o.shape == (BATCH, OUT_F)
        assert jnp.allclose(o, r, atol=1e-4, rtol=1e-4)

    print("KERNEL_OK")
</pallas_src>

<mosaic_0001>
module attributes {stable_mosaic.version = 11 : i64} {
  func.func @_ensemble_kernel(%arg0: memref<3x8x32xf32, #tpu.memory_space<vmem>>, %arg1: memref<3x64x32xf32, #tpu.memory_space<vmem>>, %arg2: memref<3x1x64xf32, #tpu.memory_space<vmem>>, %arg3: memref<3x16x64xf32, #tpu.memory_space<vmem>>, %arg4: memref<3x1x16xf32, #tpu.memory_space<vmem>>, %arg5: memref<3x8x16xf32, #tpu.memory_space<vmem>>) attributes {dimension_semantics = [], scalar_prefetch = 0 : i64, scratch_operands = 0 : i64, tpu.core_type = #tpu.core_type<tc>} {
    %c0 = arith.constant 0 : index
    %c0_0 = arith.constant 0 : index
    %c0_1 = arith.constant 0 : index
    %0 = vector.load %arg0[%c0, %c0_0, %c0_1] : memref<3x8x32xf32, #tpu.memory_space<vmem>>, vector<3x8x32xf32>
    %c0_2 = arith.constant 0 : index
    %c0_3 = arith.constant 0 : index
    %c0_4 = arith.constant 0 : index
    %1 = vector.load %arg1[%c0_2, %c0_3, %c0_4] : memref<3x64x32xf32, #tpu.memory_space<vmem>>, vector<3x64x32xf32>
    %c0_5 = arith.constant 0 : index
    %c0_6 = arith.constant 0 : index
    %c0_7 = arith.constant 0 : index
    %2 = vector.load %arg2[%c0_5, %c0_6, %c0_7] : memref<3x1x64xf32, #tpu.memory_space<vmem>>, vector<3x1x64xf32>
    %c0_8 = arith.constant 0 : index
    %c0_9 = arith.constant 0 : index
    %c0_10 = arith.constant 0 : index
    %3 = vector.load %arg3[%c0_8, %c0_9, %c0_10] : memref<3x16x64xf32, #tpu.memory_space<vmem>>, vector<3x16x64xf32>
    %c0_11 = arith.constant 0 : index
    %c0_12 = arith.constant 0 : index
    %c0_13 = arith.constant 0 : index
    %4 = vector.load %arg4[%c0_11, %c0_12, %c0_13] : memref<3x1x16xf32, #tpu.memory_space<vmem>>, vector<3x1x16xf32>
    %cst = arith.constant dense<0.000000e+00> : vector<3x8x64xf32>
    %5 = tpu.matmul %0, %1, %cst {dimension_numbers = #tpu.dot_dimension_numbers<[2], [2], [1], [1], [0, 0, 0, 1, 1, 1], [0], [0]>} : vector<3x8x32xf32>, vector<3x64x32xf32>, vector<3x8x64xf32> -> vector<3x8x64xf32>
    %6 = vector.broadcast %2 : vector<3x1x64xf32> to vector<3x8x64xf32>
    %7 = arith.addf %5, %6 : vector<3x8x64xf32>
    %cst_14 = arith.constant 0.000000e+00 : f32
    %8 = vector.broadcast %cst_14 : f32 to vector<3x8x64xf32>
    %9 = arith.maximumf %7, %8 : vector<3x8x64xf32>
    %cst_15 = arith.constant dense<0.000000e+00> : vector<3x8x16xf32>
    %10 = tpu.matmul %9, %3, %cst_15 {dimension_numbers = #tpu.dot_dimension_numbers<[2], [2], [1], [1], [0, 0, 0, 1, 1, 1], [0], [0]>} : vector<3x8x64xf32>, vector<3x16x64xf32>, vector<3x8x16xf32> -> vector<3x8x16xf32>
    %11 = vector.broadcast %4 : vector<3x1x16xf32> to vector<3x8x16xf32>
    %12 = arith.addf %10, %11 : vector<3x8x16xf32>
    %c0_16 = arith.constant 0 : index
    %c0_17 = arith.constant 0 : index
    %c0_18 = arith.constant 0 : index
    %13 = vector.load %arg5[%c0_16, %c0_17, %c0_18] : memref<3x8x16xf32, #tpu.memory_space<vmem>>, vector<3x8x16xf32>
    tpu.vector_store %arg5[%c0_16, %c0_17, %c0_18], %12 {strides = array<i32>} : memref<3x8x16xf32, #tpu.memory_space<vmem>>, vector<3x8x16xf32>,
    return
  }
}

</mosaic_0001>

<llo_original>
// kernel: ensemble_forward_stacked.1
$region0: #{ensemble_forward_stacked.1}
  #allocation0 [shape = 'u32[]', space=smem, size = 0x4, offset = 0x4, fixed_abs, tag = 'smem constant byte address 0x4 - core index']
  #allocation1 [shape = 'u32[144,128]{1,0:T(1,128)}', space=vmem, size = 0x12000, scoped, tag = 'internal scratch']
  %s0 = inlined_call_operand.vmem [shape: f32[3,8,32], index: 0, kind: input, shape index: {}]
  %s1 = inlined_call_operand.vmem [shape: f32[3,64,32], index: 1, kind: input, shape index: {}]
  %s2 = inlined_call_operand.vmem [shape: f32[3,1,64], index: 2, kind: input, shape index: {}]
  %s3 = inlined_call_operand.vmem [shape: f32[3,16,64], index: 3, kind: input, shape index: {}]
  %s4 = inlined_call_operand.vmem [shape: f32[3,1,16], index: 4, kind: input, shape index: {}]
  %s5 = inlined_call_operand.hbm [shape: f32[3,8,16], index: 5, kind: output, shape index: {}]
  %s6 = sld [smem:[#allocation0]]
  $region30: #{ensemble_forward_stacked.1} parent=0
    _
  %s8 = ssub.s32 1, %s6
  %s9 = scalar_select 0, %s8, %s6
  $region1: #{ensemble_forward_stacked.1} parent=0
    #allocation2 [shape = 'u8[12288]{0}', space=vmem, size = 0x3000, scoped, tag = 'output window, operand 0, single buffered']
    #allocation3 [shape = 's32[1]{0}', space=sflag, size = 0x4, scoped, tag = 'scoped memory for ensemble_forward_stacked.1']
    %10 = vsyncpa [#allocation3], 0
    // Predicated region
    $region2: #{ensemble_forward_stacked.1} parent=1 // pred_check
      _
    $region3: #{ensemble_forward_stacked.1} parent=1 // pred_check_branch
      %12 = sbr.rel (0) target = $region5
    $region4: #{ensemble_forward_stacked.1} parent=1 // pred_region
      _
    $region5: #{ensemble_forward_stacked.1} parent=1 // pred_fallthru
      _
    // Predicated region
    $region6: #{ensemble_forward_stacked.1} parent=1 // pred_check
      _
    $region7: #{ensemble_forward_stacked.1} parent=1 // pred_check_branch
      %14 = sbr.rel (0) target = $region9
    $region8: #{ensemble_forward_stacked.1} parent=1 // pred_region
      _
    $region9: #{ensemble_forward_stacked.1} parent=1 // pred_fallthru
      _
    // Predicated region
    $region10: #{ensemble_forward_stacked.1} parent=1 // pred_check
      _
    $region11: #{ensemble_forward_stacked.1} parent=1 // pred_check_branch
      %16 = sbr.rel (0) target = $region13
    $region12: #{ensemble_forward_stacked.1} parent=1 // pred_region
      _
    $region13: #{ensemble_forward_stacked.1} parent=1 // pred_fallthru
      _
    // Predicated region
    $region14: #{ensemble_forward_stacked.1} parent=1 // pred_check
      _
    $region15: #{ensemble_forward_stacked.1} parent=1 // pred_check_branch
      %18 = sbr.rel (0) target = $region17
    $region16: #{ensemble_forward_stacked.1} parent=1 // pred_region
      _
    $region17: #{ensemble_forward_stacked.1} parent=1 // pred_fallthru
      _
    // Predicated region
    $region18: #{ensemble_forward_stacked.1} parent=1 // pred_check
      _
    $region19: #{ensemble_forward_stacked.1} parent=1 // pred_check_branch
      %20 = sbr.rel (0) target = $region21
    $region20: #{ensemble_forward_stacked.1} parent=1 // pred_region
      _
    $region21: #{ensemble_forward_stacked.1} parent=1 // pred_fallthru
      _
    %v21 = vld [vmem:[%s0] sm:$0xff]
    %v22 = vld [vmem:[%s0 + $0x8] sm:$0xff]
    %v23 = vld [vmem:[%s0 + $0x10] sm:$0xff]
    %v24 = vld [vmem:[%s1] sm:$0xff]
    %v25 = vld [vmem:[%s1 + $0x8] sm:$0xff]
    %v26 = vld [vmem:[%s1 + $0x10] sm:$0xff]
    %v27 = vld [vmem:[%s1 + $0x18] sm:$0xff]
    %v28 = vld [vmem:[%s1 + $0x20] sm:$0xff]
    %v29 = vld [vmem:[%s1 + $0x28] sm:$0xff]
    %v30 = vld [vmem:[%s1 + $0x30] sm:$0xff]
    %v31 = vld [vmem:[%s1 + $0x38] sm:$0xff]
    %v32 = vld [vmem:[%s1 + $0x40] sm:$0xff]
    %v33 = vld [vmem:[%s1 + $0x48] sm:$0xff]
    %v34 = vld [vmem:[%s1 + $0x50] sm:$0xff]
    %v35 = vld [vmem:[%s1 + $0x58] sm:$0xff]
    %v36 = vld [vmem:[%s1 + $0x60] sm:$0xff]
    %v37 = vld [vmem:[%s1 + $0x68] sm:$0xff]
    %v38 = vld [vmem:[%s1 + $0x70] sm:$0xff]
    %v39 = vld [vmem:[%s1 + $0x78] sm:$0xff]
    %v40 = vld [vmem:[%s1 + $0x80] sm:$0xff]
    %v41 = vld [vmem:[%s1 + $0x88] sm:$0xff]
    %v42 = vld [vmem:[%s1 + $0x90] sm:$0xff]
    %v43 = vld [vmem:[%s1 + $0x98] sm:$0xff]
    %v44 = vld [vmem:[%s1 + $0xa0] sm:$0xff]
    %v45 = vld [vmem:[%s1 + $0xa8] sm:$0xff]
    %v46 = vld [vmem:[%s1 + $0xb0] sm:$0xff]
    %v47 = vld [vmem:[%s1 + $0xb8] sm:$0xff]
    %v48 = vld [vmem:[%s2] sm:$0x1]
    %v49 = vld [vmem:[%s2 + $0x1] sm:$0x1]
    %v50 = vld [vmem:[%s2 + $0x2] sm:$0x1]
    %v51 = vld [vmem:[%s3] sm:$0xff]
    %v52 = vld [vmem:[%s3 + $0x8] sm:$0xff]
    %v53 = vld [vmem:[%s3 + $0x10] sm:$0xff]
    %v54 = vld [vmem:[%s3 + $0x18] sm:$0xff]
    %v55 = vld [vmem:[%s3 + $0x20] sm:$0xff]
    %v56 = vld [vmem:[%s3 + $0x28] sm:$0xff]
    %v57 = vld [vmem:[%s4] sm:$0x1]
    %v58 = vld [vmem:[%s4 + $0x1] sm:$0x1]
    %v59 = vld [vmem:[%s4 + $0x2] sm:$0x1]
    %v63 = vlaneseq
    %v64 = vshrl.u32 %v63, 7
    %v65 = vsub.s32 0, %v64
    %v66 = vrot.slane %v48, %v65
    %v67 = vlaneseq
    %v68 = vshrl.u32 %v67, 7
    %v69 = vsub.s32 0, %v68
    %v70 = vrot.slane %v49, %v69
    %v71 = vlaneseq
    %v72 = vshrl.u32 %v71, 7
    %v73 = vsub.s32 0, %v72
    %v74 = vrot.slane %v50, %v73
    %vm78 = vcmask 261120
    %v80 = vsel %vm78, %v21, 0
    %v83 = vsel %vm78, %v24, 0
    %v86 = vsel %vm78, %v25, 0
    %v89 = vsel %vm78, %v26, 0
    %v92 = vsel %vm78, %v27, 0
    %v95 = vsel %vm78, %v28, 0
    %v98 = vsel %vm78, %v29, 0
    %v101 = vsel %vm78, %v30, 0
    %v104 = vsel %vm78, %v31, 0
    %106 = vmatprep.subr.mxu0 0.0
    %107 = vmatpush1.xpose.msra.mxu0 0.0
    %108 = vmatprep.subr.mxu0 0.0
    %109 = vmatpush1.xpose.msra.mxu0 0.0
    %110 = vmatprep.subr.mxu0 0.0
    %111 = vmatpush1.xpose.msra.mxu0 0.0
    %112 = vmatprep.subr.mxu0 0.0
    %113 = vmatpush1.xpose.msra.mxu0 0.0
    %114 = vmatprep.subr.mxu0 0.0
    %115 = vmatpush1.xpose.msra.mxu0 0.0
    %116 = vmatprep.subr.mxu0 0.0
    %117 = vmatpush1.xpose.msra.mxu0 0.0
    %118 = vmatprep.subr.mxu0 0.0
    %119 = vmatpush1.xpose.msra.mxu0 0.0
    %120 = vmatprep.subr.mxu0 0.0
    %121 = vmatpush1.xpose.msra.mxu0 0.0
    %122 = vmatprep.subr.mxu0 0.0
    %123 = vmatpush1.xpose.msra.mxu0 %v104
    %124 = vmatprep.subr.mxu0 0.0
    %125 = vmatpush1.xpose.msra.mxu0 %v101
    %126 = vmatprep.subr.mxu0 0.0
    %127 = vmatpush1.xpose.msra.mxu0 %v98
    %128 = vmatprep.subr.mxu0 0.0
    %129 = vmatpush1.xpose.msra.mxu0 %v95
    %130 = vmatprep.subr.mxu0 0.0
    %131 = vmatpush1.xpose.msra.mxu0 %v92
    %132 = vmatprep.subr.mxu0 0.0
    %133 = vmatpush1.xpose.msra.mxu0 %v89
    %134 = vmatprep.subr.mxu0 0.0
    %135 = vmatpush1.xpose.msra.mxu0 %v86
    %136 = vmatprep.subr.mxu0 0.0
    %137 = vmatpush1.xpose.msra.mxu0 %v83
    %138 = vmatprep.subr.mxu0 0.0
    %139 = vmatpush2.xpose.msra.mxu0 0.0
    %140 = vmatprep.subr.mxu0 0.0
    %141 = vmatpush2.xpose.msra.mxu0 0.0
    %142 = vmatprep.subr.mxu0 0.0
    %143 = vmatpush2.xpose.msra.mxu0 0.0
    %144 = vmatprep.subr.mxu0 0.0
    %145 = vmatpush2.xpose.msra.mxu0 0.0
    %146 = vmatprep.subr.mxu0 0.0
    %147 = vmatpush2.xpose.msra.mxu0 0.0
    %148 = vmatprep.subr.mxu0 0.0
    %149 = vmatpush2.xpose.msra.mxu0 0.0
    %150 = vmatprep.subr.mxu0 0.0
    %151 = vmatpush2.xpose.msra.mxu0 0.0
    %152 = vmatprep.subr.mxu0 0.0
    %153 = vmatpush2.xpose.msra.mxu0 0.0
    %154 = vmatprep.subr.mxu0 0.0
    %155 = vmatpush2.xpose.msra.mxu0 0.0
    %156 = vmatprep.subr.mxu0 0.0
    %157 = vmatpush2.xpose.msra.mxu0 0.0
    %158 = vmatprep.subr.mxu0 0.0
    %159 = vmatpush2.xpose.msra.mxu0 0.0
    %160 = vmatprep.subr.mxu0 0.0
    %161 = vmatpush2.xpose.msra.mxu0 0.0
    %162 = vmatprep.subr.mxu0 0.0
    %163 = vmatpush2.xpose.msra.mxu0 0.0
    %164 = vmatprep.subr.mxu0 0.0
    %165 = vmatpush2.xpose.msra.mxu0 0.0
    %166 = vmatprep.subr.mxu0 0.0
    %167 = vmatpush2.xpose.msra.mxu0 0.0
    %168 = vmatprep.subr.mxu0 0.0
    %169 = vmatpush2.xpose.msra.mxu0 0.0
    %170 = vmatprep.mubr.f32.mxu0 0.0
    %171 = vmatmul.mubr.f32.gmra.mxu0 %v80
    %v172 = vpop.f32.mrf.mxu0
    %v173 = vadd.f32 %v66, %v172
    %v174 = vpop.f32.mrf.mxu0
    %175 = vdwg.mxu0
    %v177 = vsel %vm78, %v22, 0
    %v180 = vsel %vm78, %v32, 0
    %v183 = vsel %vm78, %v33, 0
    %v186 = vsel %vm78, %v34, 0
    %v189 = vsel %vm78, %v35, 0
    %v192 = vsel %vm78, %v36, 0
    %v195 = vsel %vm78, %v37, 0
    %v198 = vsel %vm78, %v38, 0
    %v201 = vsel %vm78, %v39, 0
    %203 = vmatprep.subr.mxu0 0.0
    %204 = vmatpush1.xpose.msra.mxu0 0.0
    %205 = vmatprep.subr.mxu0 0.0
    %206 = vmatpush1.xpose.msra.mxu0 0.0
    %207 = vmatprep.subr.mxu0 0.0
    %208 = vmatpush1.xpose.msra.mxu0 0.0
    %209 = vmatprep.subr.mxu0 0.0
    %210 = vmatpush1.xpose.msra.mxu0 0.0
    %211 = vmatprep.subr.mxu0 0.0
    %212 = vmatpush1.xpose.msra.mxu0 0.0
    %213 = vmatprep.subr.mxu0 0.0
    %214 = vmatpush1.xpose.msra.mxu0 0.0
    %215 = vmatprep.subr.mxu0 0.0
    %216 = vmatpush1.xpose.msra.mxu0 0.0
    %217 = vmatprep.subr.mxu0 0.0
    %218 = vmatpush1.xpose.msra.mxu0 0.0
    %219 = vmatprep.subr.mxu0 0.0
    %220 = vmatpush1.xpose.msra.mxu0 %v201
    %221 = vmatprep.subr.mxu0 0.0
    %222 = vmatpush1.xpose.msra.mxu0 %v198
    %223 = vmatprep.subr.mxu0 0.0
    %224 = vmatpush1.xpose.msra.mxu0 %v195
    %225 = vmatprep.subr.mxu0 0.0
    %226 = vmatpush1.xpose.msra.mxu0 %v192
    %227 = vmatprep.subr.mxu0 0.0
    %228 = vmatpush1.xpose.msra.mxu0 %v189
    %229 = vmatprep.subr.mxu0 0.0
    %230 = vmatpush1.xpose.msra.mxu0 %v186
    %231 = vmatprep.subr.mxu0 0.0
    %232 = vmatpush1.xpose.msra.mxu0 %v183
    %233 = vmatprep.subr.mxu0 0.0
    %234 = vmatpush1.xpose.msra.mxu0 %v180
    %235 = vmatprep.subr.mxu0 0.0
    %236 = vmatpush2.xpose.msra.mxu0 0.0
    %237 = vmatprep.subr.mxu0 0.0
    %238 = vmatpush2.xpose.msra.mxu0 0.0
    %239 = vmatprep.subr.mxu0 0.0
    %240 = vmatpush2.xpose.msra.mxu0 0.0
    %241 = vmatprep.subr.mxu0 0.0
    %242 = vmatpush2.xpose.msra.mxu0 0.0
    %243 = vmatprep.subr.mxu0 0.0
    %244 = vmatpush2.xpose.msra.mxu0 0.0
    %245 = vmatprep.subr.mxu0 0.0
    %246 = vmatpush2.xpose.msra.mxu0 0.0
    %247 = vmatprep.subr.mxu0 0.0
    %248 = vmatpush2.xpose.msra.mxu0 0.0
    %249 = vmatprep.subr.mxu0 0.0
    %250 = vmatpush2.xpose.msra.mxu0 0.0
    %251 = vmatprep.subr.mxu0 0.0
    %252 = vmatpush2.xpose.msra.mxu0 0.0
    %253 = vmatprep.subr.mxu0 0.0
    %254 = vmatpush2.xpose.msra.mxu0 0.0
    %255 = vmatprep.subr.mxu0 0.0
    %256 = vmatpush2.xpose.msra.mxu0 0.0
    %257 = vmatprep.subr.mxu0 0.0
    %258 = vmatpush2.xpose.msra.mxu0 0.0
    %259 = vmatprep.subr.mxu0 0.0
    %260 = vmatpush2.xpose.msra.mxu0 0.0
    %261 = vmatprep.subr.mxu0 0.0
    %262 = vmatpush2.xpose.msra.mxu0 0.0
    %263 = vmatprep.subr.mxu0 0.0
    %264 = vmatpush2.xpose.msra.mxu0 0.0
    %265 = vmatprep.subr.mxu0 0.0
    %266 = vmatpush2.xpose.msra.mxu0 0.0
    %267 = vmatprep.mubr.f32.mxu0 0.0
    %268 = vmatmul.mubr.f32.gmra.mxu0 %v177
    %v269 = vpop.f32.mrf.mxu0
    %v270 = vadd.f32 %v70, %v269
    %v271 = vpop.f32.mrf.mxu0
    %272 = vdwg.mxu0
    %v274 = vsel %vm78, %v23, 0
    %v277 = vsel %vm78, %v40, 0
    %v280 = vsel %vm78, %v41, 0
    %v283 = vsel %vm78, %v42, 0
    %v286 = vsel %vm78, %v43, 0
    %v289 = vsel %vm78, %v44, 0
    %v292 = vsel %vm78, %v45, 0
    %v295 = vsel %vm78, %v46, 0
    %v298 = vsel %vm78, %v47, 0
    %300 = vmatprep.subr.mxu0 0.0
    %301 = vmatpush1.xpose.msra.mxu0 0.0
    %302 = vmatprep.subr.mxu0 0.0
    %303 = vmatpush1.xpose.msra.mxu0 0.0
    %304 = vmatprep.subr.mxu0 0.0
    %305 = vmatpush1.xpose.msra.mxu0 0.0
    %306 = vmatprep.subr.mxu0 0.0
    %307 = vmatpush1.xpose.msra.mxu0 0.0
    %308 = vmatprep.subr.mxu0 0.0
    %309 = vmatpush1.xpose.msra.mxu0 0.0
    %310 = vmatprep.subr.mxu0 0.0
    %311 = vmatpush1.xpose.msra.mxu0 0.0
    %312 = vmatprep.subr.mxu0 0.0
    %313 = vmatpush1.xpose.msra.mxu0 0.0
    %314 = vmatprep.subr.mxu0 0.0
    %315 = vmatpush1.xpose.msra.mxu0 0.0
    %316 = vmatprep.subr.mxu0 0.0
    %317 = vmatpush1.xpose.msra.mxu0 %v298
    %318 = vmatprep.subr.mxu0 0.0
    %319 = vmatpush1.xpose.msra.mxu0 %v295
    %320 = vmatprep.subr.mxu0 0.0
    %321 = vmatpush1.xpose.msra.mxu0 %v292
    %322 = vmatprep.subr.mxu0 0.0
    %323 = vmatpush1.xpose.msra.mxu0 %v289
    %324 = vmatprep.subr.mxu0 0.0
    %325 = vmatpush1.xpose.msra.mxu0 %v286
    %326 = vmatprep.subr.mxu0 0.0
    %327 = vmatpush1.xpose.msra.mxu0 %v283
    %328 = vmatprep.subr.mxu0 0.0
    %329 = vmatpush1.xpose.msra.mxu0 %v280
    %330 = vmatprep.subr.mxu0 0.0
    %331 = vmatpush1.xpose.msra.mxu0 %v277
    %332 = vmatprep.subr.mxu0 0.0
    %333 = vmatpush2.xpose.msra.mxu0 0.0
    %334 = vmatprep.subr.mxu0 0.0
    %335 = vmatpush2.xpose.msra.mxu0 0.0
    %336 = vmatprep.subr.mxu0 0.0
    %337 = vmatpush2.xpose.msra.mxu0 0.0
    %338 = vmatprep.subr.mxu0 0.0
    %339 = vmatpush2.xpose.msra.mxu0 0.0
    %340 = vmatprep.subr.mxu0 0.0
    %341 = vmatpush2.xpose.msra.mxu0 0.0
    %342 = vmatprep.subr.mxu0 0.0
    %343 = vmatpush2.xpose.msra.mxu0 0.0
    %344 = vmatprep.subr.mxu0 0.0
    %345 = vmatpush2.xpose.msra.mxu0 0.0
    %346 = vmatprep.subr.mxu0 0.0
    %347 = vmatpush2.xpose.msra.mxu0 0.0
    %348 = vmatprep.subr.mxu0 0.0
    %349 = vmatpush2.xpose.msra.mxu0 0.0
    %350 = vmatprep.subr.mxu0 0.0
    %351 = vmatpush2.xpose.msra.mxu0 0.0
    %352 = vmatprep.subr.mxu0 0.0
    %353 = vmatpush2.xpose.msra.mxu0 0.0
    %354 = vmatprep.subr.mxu0 0.0
    %355 = vmatpush2.xpose.msra.mxu0 0.0
    %356 = vmatprep.subr.mxu0 0.0
    %357 = vmatpush2.xpose.msra.mxu0 0.0
    %358 = vmatprep.subr.mxu0 0.0
    %359 = vmatpush2.xpose.msra.mxu0 0.0
    %360 = vmatprep.subr.mxu0 0.0
    %361 = vmatpush2.xpose.msra.mxu0 0.0
    %362 = vmatprep.subr.mxu0 0.0
    %363 = vmatpush2.xpose.msra.mxu0 0.0
    %364 = vmatprep.mubr.f32.mxu0 0.0
    %365 = vmatmul.mubr.f32.gmra.mxu0 %v274
    %v366 = vpop.f32.mrf.mxu0
    %v367 = vadd.f32 %v74, %v366
    %v368 = vpop.f32.mrf.mxu0
    %369 = vdwg.mxu0
    %v370 = vmax.f32 %v173, 0.0
    %v371 = vmax.f32 %v270, 0.0
    %v372 = vmax.f32 %v367, 0.0
    %v376 = vlaneseq
    %v377 = vshrl.u32 %v376, 7
    %v378 = vsub.s32 0, %v377
    %v379 = vrot.slane %v57, %v378
    %v380 = vlaneseq
    %v381 = vshrl.u32 %v380, 7
    %v382 = vsub.s32 0, %v381
    %v383 = vrot.slane %v58, %v382
    %v384 = vlaneseq
    %v385 = vshrl.u32 %v384, 7
    %v386 = vsub.s32 0, %v385
    %v387 = vrot.slane %v59, %v386
    %vm391 = vcmask 523264
    %v393 = vsel %vm391, %v370, 0
    %v396 = vsel %vm391, %v51, 0
    %v399 = vsel %vm391, %v52, 0
    %401 = vmatprep.subr.mxu0 0.0
    %402 = vmatpush1.xpose.msra.mxu0 0.0
    %403 = vmatprep.subr.mxu0 0.0
    %404 = vmatpush1.xpose.msra.mxu0 0.0
    %405 = vmatprep.subr.mxu0 0.0
    %406 = vmatpush1.xpose.msra.mxu0 0.0
    %407 = vmatprep.subr.mxu0 0.0
    %408 = vmatpush1.xpose.msra.mxu0 0.0
    %409 = vmatprep.subr.mxu0 0.0
    %410 = vmatpush1.xpose.msra.mxu0 0.0
    %411 = vmatprep.subr.mxu0 0.0
    %412 = vmatpush1.xpose.msra.mxu0 0.0
    %413 = vmatprep.subr.mxu0 0.0
    %414 = vmatpush1.xpose.msra.mxu0 0.0
    %415 = vmatprep.subr.mxu0 0.0
    %416 = vmatpush1.xpose.msra.mxu0 0.0
    %417 = vmatprep.subr.mxu0 0.0
    %418 = vmatpush1.xpose.msra.mxu0 0.0
    %419 = vmatprep.subr.mxu0 0.0
    %420 = vmatpush1.xpose.msra.mxu0 0.0
    %421 = vmatprep.subr.mxu0 0.0
    %422 = vmatpush1.xpose.msra.mxu0 0.0
    %423 = vmatprep.subr.mxu0 0.0
    %424 = vmatpush1.xpose.msra.mxu0 0.0
    %425 = vmatprep.subr.mxu0 0.0
    %426 = vmatpush1.xpose.msra.mxu0 0.0
    %427 = vmatprep.subr.mxu0 0.0
    %428 = vmatpush1.xpose.msra.mxu0 0.0
    %429 = vmatprep.subr.mxu0 0.0
    %430 = vmatpush1.xpose.msra.mxu0 %v399
    %431 = vmatprep.subr.mxu0 0.0
    %432 = vmatpush1.xpose.msra.mxu0 %v396
    %433 = vmatprep.subr.mxu0 0.0
    %434 = vmatpush2.xpose.msra.mxu0 0.0
    %435 = vmatprep.subr.mxu0 0.0
    %436 = vmatpush2.xpose.msra.mxu0 0.0
    %437 = vmatprep.subr.mxu0 0.0
    %438 = vmatpush2.xpose.msra.mxu0 0.0
    %439 = vmatprep.subr.mxu0 0.0
    %440 = vmatpush2.xpose.msra.mxu0 0.0
    %441 = vmatprep.subr.mxu0 0.0
    %442 = vmatpush2.xpose.msra.mxu0 0.0
    %443 = vmatprep.subr.mxu0 0.0
    %444 = vmatpush2.xpose.msra.mxu0 0.0
    %445 = vmatprep.subr.mxu0 0.0
    %446 = vmatpush2.xpose.msra.mxu0 0.0
    %447 = vmatprep.subr.mxu0 0.0
    %448 = vmatpush2.xpose.msra.mxu0 0.0
    %449 = vmatprep.subr.mxu0 0.0
    %450 = vmatpush2.xpose.msra.mxu0 0.0
    %451 = vmatprep.subr.mxu0 0.0
    %452 = vmatpush2.xpose.msra.mxu0 0.0
    %453 = vmatprep.subr.mxu0 0.0
    %454 = vmatpush2.xpose.msra.mxu0 0.0
    %455 = vmatprep.subr.mxu0 0.0
    %456 = vmatpush2.xpose.msra.mxu0 0.0
    %457 = vmatprep.subr.mxu0 0.0
    %458 = vmatpush2.xpose.msra.mxu0 0.0
    %459 = vmatprep.subr.mxu0 0.0
    %460 = vmatpush2.xpose.msra.mxu0 0.0
    %461 = vmatprep.subr.mxu0 0.0
    %462 = vmatpush2.xpose.msra.mxu0 0.0
    %463 = vmatprep.subr.mxu0 0.0
    %464 = vmatpush2.xpose.msra.mxu0 0.0
    %465 = vmatprep.mubr.f32.mxu0 0.0
    %466 = vmatmul.mubr.f32.gmra.mxu0 %v393
    %v467 = vpop.f32.mrf.mxu0
    %v468 = vadd.f32 %v379, %v467
    %v469 = vpop.f32.mrf.mxu0
    %470 = vdwg.mxu0
    %v472 = vsel %vm391, %v371, 0
    %v475 = vsel %vm391, %v53, 0
    %v478 = vsel %vm391, %v54, 0
    %480 = vmatprep.subr.mxu0 0.0
    %481 = vmatpush1.xpose.msra.mxu0 0.0
    %482 = vmatprep.subr.mxu0 0.0
    %483 = vmatpush1.xpose.msra.mxu0 0.0
    %484 = vmatprep.subr.mxu0 0.0
    %485 = vmatpush1.xpose.msra.mxu0 0.0
    %486 = vmatprep.subr.mxu0 0.0
    %487 = vmatpush1.xpose.msra.mxu0 0.0
    %488 = vmatprep.subr.mxu0 0.0
    %489 = vmatpush1.xpose.msra.mxu0 0.0
    %490 = vmatprep.subr.mxu0 0.0
    %491 = vmatpush1.xpose.msra.mxu0 0.0
    %492 = vmatprep.subr.mxu0 0.0
    %493 = vmatpush1.xpose.msra.mxu0 0.0
    %494 = vmatprep.subr.mxu0 0.0
    %495 = vmatpush1.xpose.msra.mxu0 0.0
    %496 = vmatprep.subr.mxu0 0.0
    %497 = vmatpush1.xpose.msra.mxu0 0.0
    %498 = vmatprep.subr.mxu0 0.0
    %499 = vmatpush1.xpose.msra.mxu0 0.0
    %500 = vmatprep.subr.mxu0 0.0
    %501 = vmatpush1.xpose.msra.mxu0 0.0
    %502 = vmatprep.subr.mxu0 0.0
    %503 = vmatpush1.xpose.msra.mxu0 0.0
    %504 = vmatprep.subr.mxu0 0.0
    %505 = vmatpush1.xpose.msra.mxu0 0.0
    %506 = vmatprep.subr.mxu0 0.0
    %507 = vmatpush1.xpose.msra.mxu0 0.0
    %508 = vmatprep.subr.mxu0 0.0
    %509 = vmatpush1.xpose.msra.mxu0 %v478
    %510 = vmatprep.subr.mxu0 0.0
    %511 = vmatpush1.xpose.msra.mxu0 %v475
    %512 = vmatprep.subr.mxu0 0.0
    %513 = vmatpush2.xpose.msra.mxu0 0.0
    %514 = vmatprep.subr.mxu0 0.0
    %515 = vmatpush2.xpose.msra.mxu0 0.0
    %516 = vmatprep.subr.mxu0 0.0
    %517 = vmatpush2.xpose.msra.mxu0 0.0
    %518 = vmatprep.subr.mxu0 0.0
    %519 = vmatpush2.xpose.msra.mxu0 0.0
    %520 = vmatprep.subr.mxu0 0.0
    %521 = vmatpush2.xpose.msra.mxu0 0.0
    %522 = vmatprep.subr.mxu0 0.0
    %523 = vmatpush2.xpose.msra.mxu0 0.0
    %524 = vmatprep.subr.mxu0 0.0
    %525 = vmatpush2.xpose.msra.mxu0 0.0
    %526 = vmatprep.subr.mxu0 0.0
    %527 = vmatpush2.xpose.msra.mxu0 0.0
    %528 = vmatprep.subr.mxu0 0.0
    %529 = vmatpush2.xpose.msra.mxu0 0.0
    %530 = vmatprep.subr.mxu0 0.0
    %531 = vmatpush2.xpose.msra.mxu0 0.0
    %532 = vmatprep.subr.mxu0 0.0
    %533 = vmatpush2.xpose.msra.mxu0 0.0
    %534 = vmatprep.subr.mxu0 0.0
    %535 = vmatpush2.xpose.msra.mxu0 0.0
    %536 = vmatprep.subr.mxu0 0.0
    %537 = vmatpush2.xpose.msra.mxu0 0.0
    %538 = vmatprep.subr.mxu0 0.0
    %539 = vmatpush2.xpose.msra.mxu0 0.0
    %540 = vmatprep.subr.mxu0 0.0
    %541 = vmatpush2.xpose.msra.mxu0 0.0
    %542 = vmatprep.subr.mxu0 0.0
    %543 = vmatpush2.xpose.msra.mxu0 0.0
    %544 = vmatprep.mubr.f32.mxu0 0.0
    %545 = vmatmul.mubr.f32.gmra.mxu0 %v472
    %v546 = vpop.f32.mrf.mxu0
    %v547 = vadd.f32 %v383, %v546
    %v548 = vpop.f32.mrf.mxu0
    %549 = vdwg.mxu0
    %v551 = vsel %vm391, %v372, 0
    %v554 = vsel %vm391, %v55, 0
    %v557 = vsel %vm391, %v56, 0
    %559 = vmatprep.subr.mxu0 0.0
    %560 = vmatpush1.xpose.msra.mxu0 0.0
    %561 = vmatprep.subr.mxu0 0.0
    %562 = vmatpush1.xpose.msra.mxu0 0.0
    %563 = vmatprep.subr.mxu0 0.0
    %564 = vmatpush1.xpose.msra.mxu0 0.0
    %565 = vmatprep.subr.mxu0 0.0
    %566 = vmatpush1.xpose.msra.mxu0 0.0
    %567 = vmatprep.subr.mxu0 0.0
    %568 = vmatpush1.xpose.msra.mxu0 0.0
    %569 = vmatprep.subr.mxu0 0.0
    %570 = vmatpush1.xpose.msra.mxu0 0.0
    %571 = vmatprep.subr.mxu0 0.0
    %572 = vmatpush1.xpose.msra.mxu0 0.0
    %573 = vmatprep.subr.mxu0 0.0
    %574 = vmatpush1.xpose.msra.mxu0 0.0
    %575 = vmatprep.subr.mxu0 0.0
    %576 = vmatpush1.xpose.msra.mxu0 0.0
    %577 = vmatprep.subr.mxu0 0.0
    %578 = vmatpush1.xpose.msra.mxu0 0.0
    %579 = vmatprep.subr.mxu0 0.0
    %580 = vmatpush1.xpose.msra.mxu0 0.0
    %581 = vmatprep.subr.mxu0 0.0
    %582 = vmatpush1.xpose.msra.mxu0 0.0
    %583 = vmatprep.subr.mxu0 0.0
    %584 = vmatpush1.xpose.msra.mxu0 0.0
    %585 = vmatprep.subr.mxu0 0.0
    %586 = vmatpush1.xpose.msra.mxu0 0.0
    %587 = vmatprep.subr.mxu0 0.0
    %588 = vmatpush1.xpose.msra.mxu0 %v557
    %589 = vmatprep.subr.mxu0 0.0
    %590 = vmatpush1.xpose.msra.mxu0 %v554
    %591 = vmatprep.subr.mxu0 0.0
    %592 = vmatpush2.xpose.msra.mxu0 0.0
    %593 = vmatprep.subr.mxu0 0.0
    %594 = vmatpush2.xpose.msra.mxu0 0.0
    %595 = vmatprep.subr.mxu0 0.0
    %596 = vmatpush2.xpose.msra.mxu0 0.0
    %597 = vmatprep.subr.mxu0 0.0
    %598 = vmatpush2.xpose.msra.mxu0 0.0
    %599 = vmatprep.subr.mxu0 0.0
    %600 = vmatpush2.xpose.msra.mxu0 0.0
    %601 = vmatprep.subr.mxu0 0.0
    %602 = vmatpush2.xpose.msra.mxu0 0.0
    %603 = vmatprep.subr.mxu0 0.0
    %604 = vmatpush2.xpose.msra.mxu0 0.0
    %605 = vmatprep.subr.mxu0 0.0
    %606 = vmatpush2.xpose.msra.mxu0 0.0
    %607 = vmatprep.subr.mxu0 0.0
    %608 = vmatpush2.xpose.msra.mxu0 0.0
    %609 = vmatprep.subr.mxu0 0.0
    %610 = vmatpush2.xpose.msra.mxu0 0.0
    %611 = vmatprep.subr.mxu0 0.0
    %612 = vmatpush2.xpose.msra.mxu0 0.0
    %613 = vmatprep.subr.mxu0 0.0
    %614 = vmatpush2.xpose.msra.mxu0 0.0
    %615 = vmatprep.subr.mxu0 0.0
    %616 = vmatpush2.xpose.msra.mxu0 0.0
    %617 = vmatprep.subr.mxu0 0.0
    %618 = vmatpush2.xpose.msra.mxu0 0.0
    %619 = vmatprep.subr.mxu0 0.0
    %620 = vmatpush2.xpose.msra.mxu0 0.0
    %621 = vmatprep.subr.mxu0 0.0
    %622 = vmatpush2.xpose.msra.mxu0 0.0
    %623 = vmatprep.mubr.f32.mxu0 0.0
    %624 = vmatmul.mubr.f32.gmra.mxu0 %v551
    %v625 = vpop.f32.mrf.mxu0
    %v626 = vadd.f32 %v387, %v625
    %v627 = vpop.f32.mrf.mxu0
    %628 = vdwg.mxu0
    %vm629 = vcmask 130048
    %630 = vst.msk [vmem:[#allocation2] sm:$0xff] %vm629, %v468
    %631 = vst.msk [vmem:[#allocation2 + $0x8] sm:$0xff] %vm629, %v547
    %632 = vst.msk [vmem:[#allocation2 + $0x10] sm:$0xff] %vm629, %v626
    // Predicated region
    $region22: #{ensemble_forward_stacked.1} parent=1 // pred_check
      _
    $region23: #{ensemble_forward_stacked.1} parent=1 // pred_check_branch
      %634 = sbr.rel (0) target = $region25
    $region24: #{ensemble_forward_stacked.1} parent=1 // pred_region
      %s636 = ssub.s32 384, 384
      %637 = vsyncadd [#allocation3], %s636
      %s638 = sshll.u32 [#allocation2], 4
      %s639 = int_to_ptr.vmem [resolvable:$true] %s638
      %644 = dma.vmem_to_hbm [thread:$0]  %s639, 384, %s5, [#allocation3], 128, 128, 8
    $region25: #{ensemble_forward_stacked.1} parent=1 // pred_fallthru
      _
    // Predicated region
    $region26: #{ensemble_forward_stacked.1} parent=1 // pred_check
      _
    $region27: #{ensemble_forward_stacked.1} parent=1 // pred_check_branch
      %646 = sbr.rel (0) target = $region29
    $region28: #{ensemble_forward_stacked.1} parent=1 // pred_region
      %647 = dma.done [#allocation3], 384
    $region29: #{ensemble_forward_stacked.1} parent=1 // pred_fallthru
      _
    %648 = vsyncpa [#allocation3], 1

</llo_original>
